<compile_context>
chip_gen: v7x
topology: tpu7x:2x2x1
jax: 0.10.0
libtpu: 0.0.40
codegen_flags: <defaults>
</compile_context>

<pallas_src>
import math
import functools
import numpy as np

import jax
import jax.numpy as jnp
from jax.experimental import pallas as pl
from jax.experimental.pallas import tpu as pltpu


# ----------------------------- kernel -------------------------------------- #

def _pe_kernel(x_ref, pe_ref, o_ref, *, scale):
    # x_ref: (B, ts, D), pe_ref: (ts, D) -> broadcast add over the batch dim.
    # Dropout is identity (eval mode).
    o_ref[...] = x_ref[...] * scale + pe_ref[...]


# ----------------------------- wrapper -------------------------------------- #

def positional_encode(x, pe_table, *, seq_tile=512):
    """x: (B, S, D) float32, pe_table: (max_seq_len, D) float32."""
    B, S, D = x.shape
    pe = pe_table[:S]                               # slice of the registered buffer

    # Seq tile: whole S for small inputs (single block, no grid-step overhead);
    # otherwise the largest multiple-of-8 divisor of S <= seq_tile, so the
    # block's second-to-last dim satisfies the (8,128) rule.  Falls back to the
    # full S when no such divisor exists.
    if S <= seq_tile:
        ts = S
    else:
        ts = max((t for t in range(8, seq_tile + 1, 8) if S % t == 0), default=S)

    grid = (S // ts,)
    kern = functools.partial(_pe_kernel, scale=math.sqrt(D))
    return pl.pallas_call(
        kern,
        out_shape=jax.ShapeDtypeStruct((B, S, D), x.dtype),
        grid=grid,
        in_specs=[pl.BlockSpec((B, ts, D), lambda s: (0, s, 0)),
                  pl.BlockSpec((ts, D), lambda s: (s, 0))],
        out_specs=pl.BlockSpec((B, ts, D), lambda s: (0, s, 0)),
        compiler_params=pltpu.CompilerParams(
            dimension_semantics=("parallel",)),
    )(x, pe)


# ----------------------------- PE table ------------------------------------- #

def make_pe(max_seq_len, d_model):
    # Vectorized, numerically identical to the PyTorch double loop:
    #   even j -> sin(pos / 10000**(2*j/d_model))
    #   odd  j -> cos(pos / 10000**(2*j/d_model))
    pos = np.arange(max_seq_len, dtype=np.float64)[:, None]
    j = np.arange(d_model, dtype=np.float64)[None, :]
    angle = pos / np.power(10000.0, 2.0 * j / d_model)
    pe = np.where((np.arange(d_model)[None, :] % 2) == 0,
                  np.sin(angle), np.cos(angle)).astype(np.float32)
    return jnp.asarray(pe)


# ----------------------------- main ----------------------------------------- #

if __name__ == "__main__":
    B, S, d_model = 2, 8, 32
    max_seq_len = 64

    key = jax.random.PRNGKey(0)
    x = jax.random.normal(key, (B, S, d_model), jnp.float32)
    pe_table = make_pe(max_seq_len, d_model)

    out = positional_encode(x, pe_table)
    out = jax.block_until_ready(out)

    # Pure-JAX reference (eval-mode dropout = identity).
    ref = x * math.sqrt(d_model) + pe_table[:S][None, :, :]
    assert out.shape == (B, S, d_model) and out.dtype == jnp.float32
    np.testing.assert_allclose(np.asarray(out), np.asarray(ref), rtol=1e-6, atol=1e-6)
    print("KERNEL_OK")
</pallas_src>

<mosaic_0001>
module attributes {stable_mosaic.version = 11 : i64} {
  func.func @_pe_kernel(%arg0: i32, %arg1: memref<2x8x32xf32, #tpu.memory_space<vmem>>, %arg2: memref<8x32xf32, #tpu.memory_space<vmem>>, %arg3: memref<2x8x32xf32, #tpu.memory_space<vmem>>) attributes {dimension_semantics = [#tpu.dimension_semantics<parallel>], iteration_bounds = array<i64: 1>, scalar_prefetch = 0 : i64, scratch_operands = 0 : i64, tpu.core_type = #tpu.core_type<tc>, window_params = [{transform_indices = @transform_0, window_bounds = array<i64: 2, 8, 32>}, {transform_indices = @transform_1, window_bounds = array<i64: 8, 32>}, {transform_indices = @transform_2, window_bounds = array<i64: 2, 8, 32>}]} {
    %c0 = arith.constant 0 : index
    %c0_0 = arith.constant 0 : index
    %c0_1 = arith.constant 0 : index
    %0 = vector.load %arg1[%c0, %c0_0, %c0_1] : memref<2x8x32xf32, #tpu.memory_space<vmem>>, vector<2x8x32xf32>
    %cst = arith.constant 5.65685415 : f32
    %1 = vector.broadcast %cst : f32 to vector<2x8x32xf32>
    %2 = arith.mulf %0, %1 : vector<2x8x32xf32>
    %c0_2 = arith.constant 0 : index
    %c0_3 = arith.constant 0 : index
    %3 = vector.load %arg2[%c0_2, %c0_3] : memref<8x32xf32, #tpu.memory_space<vmem>>, vector<8x32xf32>
    %4 = vector.shape_cast %3 : vector<8x32xf32> to vector<1x8x32xf32>
    %5 = vector.broadcast %4 : vector<1x8x32xf32> to vector<2x8x32xf32>
    %6 = arith.addf %2, %5 : vector<2x8x32xf32>
    %c0_4 = arith.constant 0 : index
    %c0_5 = arith.constant 0 : index
    %c0_6 = arith.constant 0 : index
    %7 = vector.load %arg3[%c0_4, %c0_5, %c0_6] : memref<2x8x32xf32, #tpu.memory_space<vmem>>, vector<2x8x32xf32>
    tpu.vector_store %arg3[%c0_4, %c0_5, %c0_6], %6 {strides = array<i32>} : memref<2x8x32xf32, #tpu.memory_space<vmem>>, vector<2x8x32xf32>,
    return
  }
  func.func @transform_0(%arg0: i32) -> (i32, i32, i32) {
    %c0_i32 = arith.constant 0 : i32
    %c0_i32_0 = arith.constant 0 : i32
    %c0_i32_1 = arith.constant 0 : i32
    return %c0_i32, %arg0, %c0_i32_0 : i32, i32, i32
  }
  func.func @transform_1(%arg0: i32) -> (i32, i32) {
    %c0_i32 = arith.constant 0 : i32
    %c0_i32_0 = arith.constant 0 : i32
    return %arg0, %c0_i32 : i32, i32
  }
  func.func @transform_2(%arg0: i32) -> (i32, i32, i32) {
    %c0_i32 = arith.constant 0 : i32
    %c0_i32_0 = arith.constant 0 : i32
    %c0_i32_1 = arith.constant 0 : i32
    return %c0_i32, %arg0, %c0_i32_0 : i32, i32, i32
  }
}

</mosaic_0001>

<llo_original>
// kernel: tpu_custom_call.1
$region0: #{tpu_custom_call.1}
  #allocation0 [shape = 'u32[]', space=smem, size = 0x4, offset = 0x4, fixed_abs, tag = 'smem constant byte address 0x4 - core index']
  #allocation1 [shape = 'u32[144,128]{1,0:T(1,128)}', space=vmem, size = 0x12000, scoped, tag = 'internal scratch']
  %s0 = inlined_call_operand.hbm [shape: f32[2,8,32], index: 0, kind: input, shape index: {}]
  %s1 = inlined_call_operand.hbm [shape: f32[8,32], index: 1, kind: input, shape index: {}]
  %s2 = inlined_call_operand.hbm [shape: f32[2,8,32], index: 2, kind: output, shape index: {}]
  %s3 = sld [smem:[#allocation0]]
  $region26: #{tpu_custom_call.1} parent=0
    _
  %s5 = ssub.s32 1, %s3
  %s6 = scalar_select 0, %s5, %s3
  $region1: #{tpu_custom_call.1} parent=0
    #allocation2 [shape = 'u8[8192]{0}', space=vmem, size = 0x2000, scoped, tag = 'input window, operand 0, single buffered']
    #allocation3 [shape = 's32[1]{0}', space=sflag, size = 0x4, scoped, tag = 'scoped memory for tpu_custom_call.1']
    #allocation4 [shape = 's32[1]{0}', space=sflag, size = 0x4, scoped, tag = 'scoped memory for tpu_custom_call.1']
    #allocation5 [shape = 'u8[4096]{0}', space=vmem, size = 0x1000, scoped, tag = 'input window, operand 1, single buffered']
    #allocation6 [shape = 's32[1]{0}', space=sflag, size = 0x4, scoped, tag = 'scoped memory for tpu_custom_call.1']
    #allocation7 [shape = 'u8[8192]{0}', space=vmem, size = 0x2000, scoped, tag = 'output window, operand 0, single buffered']
    %7 = vsyncpa [#allocation3], 0
    %8 = vsyncpa [#allocation6], 0
    %9 = vsyncpa [#allocation4], 0
    // Predicated region
    $region2: #{tpu_custom_call.1} parent=1 // pred_check
      _
    $region3: #{tpu_custom_call.1} parent=1 // pred_check_branch
      %11 = sbr.rel (0) target = $region5
    $region4: #{tpu_custom_call.1} parent=1 // pred_region
      %s13 = ssub.s32 256, 256
      %14 = vsyncadd [#allocation3], %s13
      %s15 = sshll.u32 [#allocation2], 4
      %s16 = int_to_ptr.vmem [resolvable:$true] %s15
      %21 = dma.hbm_to_vmem [thread:$0]  %s0, 256, %s16, [#allocation3], 128, 128, 8
    $region5: #{tpu_custom_call.1} parent=1 // pred_fallthru
      _
    // Predicated region
    $region6: #{tpu_custom_call.1} parent=1 // pred_check
      _
    $region7: #{tpu_custom_call.1} parent=1 // pred_check_branch
      %23 = sbr.rel (0) target = $region9
    $region8: #{tpu_custom_call.1} parent=1 // pred_region
      %s25 = ssub.s32 128, 128
      %26 = vsyncadd [#allocation6], %s25
      %s28 = sshll.u32 [#allocation5], 4
      %s29 = int_to_ptr.vmem [resolvable:$true] %s28
      %31 = dma.hbm_to_vmem [thread:$0]  %s1, 128, %s29, [#allocation6]
    $region9: #{tpu_custom_call.1} parent=1 // pred_fallthru
      _
    // Predicated region
    $region10: #{tpu_custom_call.1} parent=1 // pred_check
      _
    $region11: #{tpu_custom_call.1} parent=1 // pred_check_branch
      %33 = sbr.rel (0) target = $region13
    $region12: #{tpu_custom_call.1} parent=1 // pred_region
      %34 = dma.done [#allocation3], 256
    $region13: #{tpu_custom_call.1} parent=1 // pred_fallthru
      _
    // Predicated region
    $region14: #{tpu_custom_call.1} parent=1 // pred_check
      _
    $region15: #{tpu_custom_call.1} parent=1 // pred_check_branch
      %36 = sbr.rel (0) target = $region17
    $region16: #{tpu_custom_call.1} parent=1 // pred_region
      %37 = dma.done [#allocation6], 128
    $region17: #{tpu_custom_call.1} parent=1 // pred_fallthru
      _
    %v38 = vld [vmem:[#allocation2] sm:$0xff]
    %v39 = vld [vmem:[#allocation2 + $0x8] sm:$0xff]
    %v40 = vmul.f32 %v38, 5.656854
    %v41 = vmul.f32 %v39, 5.656854
    %v42 = vld [vmem:[#allocation5] sm:$0xff]
    %v43 = vadd.f32 %v40, %v42
    %v44 = vadd.f32 %v41, %v42
    %vm45 = vcmask 261120
    %46 = vst.msk [vmem:[#allocation7] sm:$0xff] %vm45, %v43
    %47 = vst.msk [vmem:[#allocation7 + $0x8] sm:$0xff] %vm45, %v44
    // Predicated region
    $region18: #{tpu_custom_call.1} parent=1 // pred_check
      _
    $region19: #{tpu_custom_call.1} parent=1 // pred_check_branch
      %49 = sbr.rel (0) target = $region21
    $region20: #{tpu_custom_call.1} parent=1 // pred_region
      %s51 = ssub.s32 256, 256
      %52 = vsyncadd [#allocation4], %s51
      %s53 = sshll.u32 [#allocation7], 4
      %s54 = int_to_ptr.vmem [resolvable:$true] %s53
      %59 = dma.vmem_to_hbm [thread:$0]  %s54, 256, %s2, [#allocation4], 128, 128, 8
    $region21: #{tpu_custom_call.1} parent=1 // pred_fallthru
      _
    // Predicated region
    $region22: #{tpu_custom_call.1} parent=1 // pred_check
      _
    $region23: #{tpu_custom_call.1} parent=1 // pred_check_branch
      %61 = sbr.rel (0) target = $region25
    $region24: #{tpu_custom_call.1} parent=1 // pred_region
      %62 = dma.done [#allocation4], 256
    $region25: #{tpu_custom_call.1} parent=1 // pred_fallthru
      _
    %63 = vsyncpa [#allocation3], 1
    %64 = vsyncpa [#allocation6], 1
    %65 = vsyncpa [#allocation4], 1

</llo_original>
